<compile_context>
chip_gen: v5e
topology: v5e:2x2
jax: 0.10.0
libtpu: 0.0.40
codegen_flags: <defaults>
</compile_context>

<pallas_src>
import math

import jax
import jax.numpy as jnp
from jax.experimental import pallas as pl
from jax.experimental.pallas import tpu as pltpu


def _rope_kernel(x_ref, tab_ref, o_ref):
    # x_ref:   (BB, TS, L) tile of the (folded) interleaved input.
    # tab_ref: (3, TS, L) f32 fused table tile:
    #   tab[0] = cos_full      [c0, c0, c1, c1, ...]
    #   tab[1] = sin_even_neg  [-s0, 0, -s1, 0, ...]   (even lanes)
    #   tab[2] = sin_odd_pos   [ 0, s0,  0, s1, ...]   (odd lanes)
    cos = tab_ref[0]      # (TS, L)
    sin_a = tab_ref[1]    # (TS, L)
    sin_b = tab_ref[2]    # (TS, L)
    L = x_ref.shape[-1]

    # BB is a small static int (<= 8); keep the rolls strictly 2-D.
    for i in range(x_ref.shape[0]):
        x = x_ref[i].astype(jnp.float32)                 # (TS, L)
        # np.roll semantics: roll(x, s)[l] = x[(l - s) mod L]
        x_plus1 = pltpu.roll(x, shift=L - 1, axis=1)     # x[l+1] lands at lane l
        x_minus1 = pltpu.roll(x, shift=1, axis=1)        # x[l-1] lands at lane l
        #   out[2j]   = x[2j]*c_j   - x[2j+1]*s_j   (sin_b lane is 0)
        #   out[2j+1] = x[2j+1]*c_j + x[2j]*s_j     (sin_a lane is 0)
        out = x * cos + x_plus1 * sin_a + x_minus1 * sin_b
        o_ref[i] = out.astype(o_ref.dtype)


class RoPE:
    """JAX/Pallas port of the PyTorch RoPE module."""

    # Target ~512K elements (~2 MiB f32) of x per grid step, at most 8 batch
    # rows per step. Double-buffered (x in + out + fused table) worst case is
    # ~20 MiB, under the 32 MiB scoped-VMEM limit we request below.
    _MAX_BLOCK_ELEMS = 512 * 1024
    _MAX_BATCH_BLOCK = 8

    def __init__(self, theta: float, d_k: int, max_seq_len: int, dtype=None):
        assert d_k % 2 == 0
        self.d_k = d_k
        # Tables are always built in float32: low-precision positions corrupt
        # long contexts. Output dtype follows x.dtype (dtype arg unused).
        position = jnp.arange(max_seq_len, dtype=jnp.float32)                       # (L,)
        inv_freq = 1.0 / theta ** (jnp.arange(0, d_k, 2, dtype=jnp.float32) / d_k)  # (H,)
        emb = position[:, None] * inv_freq[None, :]                                  # (L, H)
        self.sin = jnp.sin(emb)   # (L, H) f32 (kept for reference/tests)
        self.cos = jnp.cos(emb)   # (L, H) f32

        # Lane-interleaved, pre-masked tables (built once):
        #   cos_full[2j] = cos[j],  cos_full[2j+1] = cos[j]
        #   sin_a[2j]    = -sin[j], sin_a[2j+1]    = 0
        #   sin_b[2j]    = 0,       sin_b[2j+1]    = +sin[j]
        zeros = jnp.zeros_like(self.sin)
        cos_full = jnp.repeat(self.cos, 2, axis=-1)                                  # (L, D)
        sin_a = jnp.stack([-self.sin, zeros], axis=-1).reshape(max_seq_len, d_k)     # (L, D)
        sin_b = jnp.stack([zeros, self.sin], axis=-1).reshape(max_seq_len, d_k)      # (L, D)
        self.tables = jnp.stack([cos_full, sin_a, sin_b], axis=0)                    # (3, L, D) f32

    def __call__(self, x: jax.Array, token_positions: jax.Array | None = None) -> jax.Array:
        assert x.shape[-1] == self.d_k
        S = x.shape[-2]
        D = self.d_k

        if token_positions is None:
            token_positions = jnp.arange(S)
        token_positions = jnp.asarray(token_positions)
        # TODO(synk): batched (B, S) token_positions (packed sequences) not supported.
        assert token_positions.shape == (S,), "token_positions must be shape (seq_len,)"

        # Gather the fused table rows by position (JAX glue, tiny vs. x traffic).
        tab = self.tables[:, token_positions, :]          # (3, S, D) f32

        # Flatten leading dims to one batch dim (no data movement).
        lead = x.shape[:-2]
        B = math.prod(lead) if lead else 1
        xb = x.reshape(B, S, D)

        # Lane fold: pack R adjacent sequence positions into the lane dim so
        # the last dim is a multiple of 128 (contiguous reshape => free).
        if D % 128 == 0:
            R = 1
        else:
            r_needed = 128 // math.gcd(D, 128)
            R = r_needed if S % r_needed == 0 else 1   # fallback: masked partial-lane stores
        S_f = S // R
        L = R * D
        xb = xb.reshape(B, S_f, L)
        tab = tab.reshape(3, S_f, L)

        # Tiling: sequence tile TS (full dim or multiple of 8), batch block BB.
        ts_cap = max(8, (self._MAX_BLOCK_ELEMS // L) // 8 * 8)
        TS = S_f if S_f <= ts_cap else ts_cap
        BB = max(1, min(B, self._MAX_BATCH_BLOCK, self._MAX_BLOCK_ELEMS // (TS * L)))
        n_s = pl.cdiv(S_f, TS)
        n_b = pl.cdiv(B, BB)

        # Grid: seq outer ("parallel", megacore-shardable), batch inner
        # ("arbitrary") so the table block index is constant across the inner
        # steps and Pallas skips re-DMAing it. Partial trailing tiles are
        # masked on store (garbage in padded table rows is harmless).
        out = pl.pallas_call(
            _rope_kernel,
            out_shape=jax.ShapeDtypeStruct((B, S_f, L), x.dtype),
            grid_spec=pltpu.PrefetchScalarGridSpec(
                num_scalar_prefetch=0,
                grid=(n_s, n_b),
                in_specs=[
                    pl.BlockSpec((BB, TS, L), lambda s, b: (b, s, 0)),
                    pl.BlockSpec((3, TS, L), lambda s, b: (0, s, 0)),
                ],
                out_specs=pl.BlockSpec((BB, TS, L), lambda s, b: (b, s, 0)),
            ),
            compiler_params=pltpu.CompilerParams(
                dimension_semantics=("parallel", "arbitrary"),
                vmem_limit_bytes=32 * 1024 * 1024),
        )(xb, tab)

        return out.reshape(*lead, S, D)


def _rope_reference(x, sin_tab, cos_tab, token_positions):
    sin = sin_tab[token_positions]
    cos = cos_tab[token_positions]
    x1 = x[..., 0::2]
    x2 = x[..., 1::2]
    rot_x1 = x1 * cos - x2 * sin
    rot_x2 = x1 * sin + x2 * cos
    out = jnp.stack([rot_x1, rot_x2], axis=-1).reshape(x.shape)
    return out


if __name__ == "__main__":
    theta = 10000.0
    d_k = 32
    max_seq_len = 16
    batch = 2
    seq = 8

    rope = RoPE(theta=theta, d_k=d_k, max_seq_len=max_seq_len)

    key = jax.random.PRNGKey(0)
    kx, kp = jax.random.split(key)
    x = jax.random.normal(kx, (batch, seq, d_k), dtype=jnp.float32)
    token_positions = jax.random.randint(kp, (seq,), 0, max_seq_len)

    # default (None) token positions
    out_default = jax.block_until_ready(rope(x, None))
    ref_default = _rope_reference(x, rope.sin, rope.cos, jnp.arange(seq))

    # explicit token positions
    out_pos = jax.block_until_ready(rope(x, token_positions))
    ref_pos = _rope_reference(x, rope.sin, rope.cos, token_positions)

    assert jnp.allclose(out_default, ref_default, atol=1e-5, rtol=1e-5)
    assert jnp.allclose(out_pos, ref_pos, atol=1e-5, rtol=1e-5)

    print("KERNEL_OK")
</pallas_src>

<mosaic_0001>
module attributes {stable_mosaic.version = 11 : i64} {
  func.func @_rope_kernel(%arg0: i32, %arg1: i32, %arg2: memref<2x2x128xf32, #tpu.memory_space<vmem>>, %arg3: memref<3x2x128xf32, #tpu.memory_space<vmem>>, %arg4: memref<2x2x128xf32, #tpu.memory_space<vmem>>) attributes {dimension_semantics = [#tpu.dimension_semantics<parallel>, #tpu.dimension_semantics<arbitrary>], iteration_bounds = array<i64: 1, 1>, scalar_prefetch = 0 : i64, scratch_operands = 0 : i64, tpu.core_type = #tpu.core_type<tc>, window_params = [{transform_indices = @transform_0, window_bounds = array<i64: 2, 2, 128>}, {transform_indices = @transform_1, window_bounds = array<i64: 3, 2, 128>}, {transform_indices = @transform_2, window_bounds = array<i64: 2, 2, 128>}]} {
    %c0 = arith.constant 0 : index
    %c0_0 = arith.constant 0 : index
    %c0_1 = arith.constant 0 : index
    %0 = vector.load %arg3[%c0, %c0_0, %c0_1] : memref<3x2x128xf32, #tpu.memory_space<vmem>>, vector<1x2x128xf32>
    %1 = vector.shape_cast %0 : vector<1x2x128xf32> to vector<2x128xf32>
    %c1 = arith.constant 1 : index
    %c0_2 = arith.constant 0 : index
    %c0_3 = arith.constant 0 : index
    %2 = vector.load %arg3[%c1, %c0_2, %c0_3] : memref<3x2x128xf32, #tpu.memory_space<vmem>>, vector<1x2x128xf32>
    %3 = vector.shape_cast %2 : vector<1x2x128xf32> to vector<2x128xf32>
    %c2 = arith.constant 2 : index
    %c0_4 = arith.constant 0 : index
    %c0_5 = arith.constant 0 : index
    %4 = vector.load %arg3[%c2, %c0_4, %c0_5] : memref<3x2x128xf32, #tpu.memory_space<vmem>>, vector<1x2x128xf32>
    %5 = vector.shape_cast %4 : vector<1x2x128xf32> to vector<2x128xf32>
    %c0_6 = arith.constant 0 : index
    %c0_7 = arith.constant 0 : index
    %c0_8 = arith.constant 0 : index
    %6 = vector.load %arg2[%c0_6, %c0_7, %c0_8] : memref<2x2x128xf32, #tpu.memory_space<vmem>>, vector<1x2x128xf32>
    %7 = vector.shape_cast %6 : vector<1x2x128xf32> to vector<2x128xf32>
    %c127_i32 = arith.constant 127 : i32
    %8 = tpu.dynamic_rotate %7 by %c127_i32 dim 1 : vector<2x128xf32>, i32 -> vector<2x128xf32>
    %c1_i32 = arith.constant 1 : i32
    %9 = tpu.dynamic_rotate %7 by %c1_i32 dim 1 : vector<2x128xf32>, i32 -> vector<2x128xf32>
    %10 = arith.mulf %7, %1 : vector<2x128xf32>
    %11 = arith.mulf %8, %3 : vector<2x128xf32>
    %12 = arith.addf %10, %11 : vector<2x128xf32>
    %13 = arith.mulf %9, %5 : vector<2x128xf32>
    %14 = arith.addf %12, %13 : vector<2x128xf32>
    %c0_9 = arith.constant 0 : index
    %c0_10 = arith.constant 0 : index
    %c0_11 = arith.constant 0 : index
    %15 = vector.load %arg4[%c0_9, %c0_10, %c0_11] : memref<2x2x128xf32, #tpu.memory_space<vmem>>, vector<1x2x128xf32>
    %16 = vector.shape_cast %15 : vector<1x2x128xf32> to vector<2x128xf32>
    %17 = vector.shape_cast %14 : vector<2x128xf32> to vector<1x2x128xf32>
    tpu.vector_store %arg4[%c0_9, %c0_10, %c0_11], %17 {strides = array<i32>} : memref<2x2x128xf32, #tpu.memory_space<vmem>>, vector<1x2x128xf32>,
    %c1_12 = arith.constant 1 : index
    %c0_13 = arith.constant 0 : index
    %c0_14 = arith.constant 0 : index
    %18 = vector.load %arg2[%c1_12, %c0_13, %c0_14] : memref<2x2x128xf32, #tpu.memory_space<vmem>>, vector<1x2x128xf32>
    %19 = vector.shape_cast %18 : vector<1x2x128xf32> to vector<2x128xf32>
    %c127_i32_15 = arith.constant 127 : i32
    %20 = tpu.dynamic_rotate %19 by %c127_i32_15 dim 1 : vector<2x128xf32>, i32 -> vector<2x128xf32>
    %c1_i32_16 = arith.constant 1 : i32
    %21 = tpu.dynamic_rotate %19 by %c1_i32_16 dim 1 : vector<2x128xf32>, i32 -> vector<2x128xf32>
    %22 = arith.mulf %19, %1 : vector<2x128xf32>
    %23 = arith.mulf %20, %3 : vector<2x128xf32>
    %24 = arith.addf %22, %23 : vector<2x128xf32>
    %25 = arith.mulf %21, %5 : vector<2x128xf32>
    %26 = arith.addf %24, %25 : vector<2x128xf32>
    %c1_17 = arith.constant 1 : index
    %c0_18 = arith.constant 0 : index
    %c0_19 = arith.constant 0 : index
    %27 = vector.load %arg4[%c1_17, %c0_18, %c0_19] : memref<2x2x128xf32, #tpu.memory_space<vmem>>, vector<1x2x128xf32>
    %28 = vector.shape_cast %27 : vector<1x2x128xf32> to vector<2x128xf32>
    %29 = vector.shape_cast %26 : vector<2x128xf32> to vector<1x2x128xf32>
    tpu.vector_store %arg4[%c1_17, %c0_18, %c0_19], %29 {strides = array<i32>} : memref<2x2x128xf32, #tpu.memory_space<vmem>>, vector<1x2x128xf32>,
    return
  }
  func.func @transform_0(%arg0: i32, %arg1: i32) -> (i32, i32, i32) {
    %c0_i32 = arith.constant 0 : i32
    %c0_i32_0 = arith.constant 0 : i32
    return %arg1, %arg0, %c0_i32 : i32, i32, i32
  }
  func.func @transform_1(%arg0: i32, %arg1: i32) -> (i32, i32, i32) {
    %c0_i32 = arith.constant 0 : i32
    %c0_i32_0 = arith.constant 0 : i32
    %c0_i32_1 = arith.constant 0 : i32
    return %c0_i32, %arg0, %c0_i32_0 : i32, i32, i32
  }
  func.func @transform_2(%arg0: i32, %arg1: i32) -> (i32, i32, i32) {
    %c0_i32 = arith.constant 0 : i32
    %c0_i32_0 = arith.constant 0 : i32
    return %arg1, %arg0, %c0_i32 : i32, i32, i32
  }
}

</mosaic_0001>

<llo_original>
// kernel: tpu_custom_call.1
$region0: #{tpu_custom_call.1}
  #allocation0 [shape = 'u32[]', space=smem, size = 0x4, offset = 0x4, fixed_abs, tag = 'smem constant byte address 0x4 - core index']
  #allocation1 [shape = 'u32[72,128]{1,0:T(1,128)}', space=vmem, size = 0x9000, scoped, tag = 'internal scratch']
  %s0 = inlined_call_operand.hbm [shape: f32[2,2,128], index: 0, kind: input, shape index: {}]
  %s1 = inlined_call_operand.hbm [shape: f32[3,2,128], index: 1, kind: input, shape index: {}]
  %s2 = inlined_call_operand.hbm [shape: f32[2,2,128], index: 2, kind: output, shape index: {}]
  %s3 = sld [smem:[#allocation0]]
  $region26: #{tpu_custom_call.1} parent=0
    _
  %s5 = ssub.s32 1, %s3
  %s6 = scalar_select 0, %s5, %s3
  $region1: #{tpu_custom_call.1} parent=0
    #allocation2 [shape = 'u8[2048]{0}', space=vmem, size = 0x800, scoped, tag = 'input window, operand 0, single buffered']
    #allocation3 [shape = 's32[1]{0}', space=sflag, size = 0x4, scoped, tag = 'scoped memory for tpu_custom_call.1']
    #allocation4 [shape = 's32[1]{0}', space=sflag, size = 0x4, scoped, tag = 'scoped memory for tpu_custom_call.1']
    #allocation5 [shape = 'u8[3072]{0}', space=vmem, size = 0xc00, scoped, tag = 'input window, operand 1, single buffered']
    #allocation6 [shape = 's32[1]{0}', space=sflag, size = 0x4, scoped, tag = 'scoped memory for tpu_custom_call.1']
    #allocation7 [shape = 'u8[2048]{0}', space=vmem, size = 0x800, scoped, tag = 'output window, operand 0, single buffered']
    %7 = vsyncpa [#allocation3], 0
    %8 = vsyncpa [#allocation6], 0
    %9 = vsyncpa [#allocation4], 0
    // Predicated region
    $region2: #{tpu_custom_call.1} parent=1 // pred_check
      _
    $region3: #{tpu_custom_call.1} parent=1 // pred_check_branch
      %11 = sbr.rel (0) target = $region5
    $region4: #{tpu_custom_call.1} parent=1 // pred_region
      %13 = vsyncadd [#allocation3], 0
      %s14 = sshll.u32 %s0, 4
      %s15 = int_to_ptr.hbm [resolvable:$true] %s14
      %s16 = sshll.u32 [#allocation2], 4
      %s17 = int_to_ptr.vmem [resolvable:$true] %s16
      %22 = dma.hbm_to_vmem [thread:$0]  %s15, 64, %s17, [#allocation3], 32, 32, 2
    $region5: #{tpu_custom_call.1} parent=1 // pred_fallthru
      _
    // Predicated region
    $region6: #{tpu_custom_call.1} parent=1 // pred_check
      _
    $region7: #{tpu_custom_call.1} parent=1 // pred_check_branch
      %24 = sbr.rel (0) target = $region9
    $region8: #{tpu_custom_call.1} parent=1 // pred_region
      %26 = vsyncadd [#allocation6], 0
      %s27 = sshll.u32 %s1, 4
      %s28 = int_to_ptr.hbm [resolvable:$true] %s27
      %s29 = sshll.u32 [#allocation5], 4
      %s30 = int_to_ptr.vmem [resolvable:$true] %s29
      %35 = dma.hbm_to_vmem [thread:$0]  %s28, 96, %s30, [#allocation6], 32, 32, 2
    $region9: #{tpu_custom_call.1} parent=1 // pred_fallthru
      _
    // Predicated region
    $region10: #{tpu_custom_call.1} parent=1 // pred_check
      _
    $region11: #{tpu_custom_call.1} parent=1 // pred_check_branch
      %37 = sbr.rel (0) target = $region13
    $region12: #{tpu_custom_call.1} parent=1 // pred_region
      %39 = dma.done [#allocation3], 64
    $region13: #{tpu_custom_call.1} parent=1 // pred_fallthru
      _
    // Predicated region
    $region14: #{tpu_custom_call.1} parent=1 // pred_check
      _
    $region15: #{tpu_custom_call.1} parent=1 // pred_check_branch
      %41 = sbr.rel (0) target = $region17
    $region16: #{tpu_custom_call.1} parent=1 // pred_region
      %43 = dma.done [#allocation6], 96
    $region17: #{tpu_custom_call.1} parent=1 // pred_fallthru
      _
    %v44 = vld [vmem:[#allocation5] sm:$0x3]
    %s45 = scalar_lea.vmem [#allocation5], 2
    %v46 = vld [vmem:[%s45] sm:$0x3]
    %s47 = scalar_lea.vmem [#allocation5], 4
    %v48 = vld [vmem:[%s47] sm:$0x3]
    %v49 = vld [vmem:[#allocation2] sm:$0x3]
    %50 = vrot.lane.b32.xlu0 %v49, 127
    %v51 = vpop.permute.xlu0 %50
    %52 = vrot.lane.b32.xlu0 %v49, 1
    %v53 = vpop.permute.xlu0 %52
    %v54 = vmul.f32 %v49, %v44
    %v55 = vmul.f32 %v51, %v46
    %v56 = vadd.f32 %v54, %v55
    %v57 = vmul.f32 %v53, %v48
    %v58 = vadd.f32 %v56, %v57
    %59 = vst [vmem:[#allocation7] sm:$0x3] %v58
    %s60 = scalar_lea.vmem [#allocation2], 2
    %v61 = vld [vmem:[%s60] sm:$0x3]
    %62 = vrot.lane.b32.xlu0 %v61, 127
    %v63 = vpop.permute.xlu0 %62
    %64 = vrot.lane.b32.xlu0 %v61, 1
    %v65 = vpop.permute.xlu0 %64
    %v66 = vmul.f32 %v61, %v44
    %v67 = vmul.f32 %v63, %v46
    %v68 = vadd.f32 %v66, %v67
    %v69 = vmul.f32 %v65, %v48
    %v70 = vadd.f32 %v68, %v69
    %s71 = scalar_lea.vmem [#allocation7], 2
    %72 = vst [vmem:[%s71] sm:$0x3] %v70
    // Predicated region
    $region18: #{tpu_custom_call.1} parent=1 // pred_check
      _
    $region19: #{tpu_custom_call.1} parent=1 // pred_check_branch
      %74 = sbr.rel (0) target = $region21
    $region20: #{tpu_custom_call.1} parent=1 // pred_region
      %76 = vsyncadd [#allocation4], 0
      %s77 = sshll.u32 [#allocation7], 4
      %s78 = int_to_ptr.vmem [resolvable:$true] %s77
      %s79 = sshll.u32 %s2, 4
      %s80 = int_to_ptr.hbm [resolvable:$true] %s79
      %85 = dma.vmem_to_hbm [thread:$0]  %s78, 64, %s80, [#allocation4], 32, 32, 2
    $region21: #{tpu_custom_call.1} parent=1 // pred_fallthru
      _
    // Predicated region
    $region22: #{tpu_custom_call.1} parent=1 // pred_check
      _
    $region23: #{tpu_custom_call.1} parent=1 // pred_check_branch
      %87 = sbr.rel (0) target = $region25
    $region24: #{tpu_custom_call.1} parent=1 // pred_region
      %89 = dma.done [#allocation4], 64
    $region25: #{tpu_custom_call.1} parent=1 // pred_fallthru
      _
    %90 = vsyncpa [#allocation3], 1
    %91 = vsyncpa [#allocation6], 1
    %92 = vsyncpa [#allocation4], 1

</llo_original>
